<compile_context>
chip_gen: v7x
topology: tpu7x:2x2x1
jax: 0.10.0
libtpu: 0.0.40
codegen_flags: <defaults>
</compile_context>

<pallas_src>
import functools

import jax
import jax.numpy as jnp
from jax import lax
from jax.experimental import pallas as pl
from jax.experimental.pallas import tpu as pltpu


# ----------------------------------------------------------------------------
# Kernel: one (image, row-band) step of fused conv3x3 + folded BN + LeakyReLU.
# ----------------------------------------------------------------------------
def _conv_bn_lrelu_kernel(x_ref, w_ref, scale_ref, shift_ref, o_ref, acc_ref,
                          *, band, width):
    # x_ref:     (H+2, W+2, Cin)   bf16  halo-padded image (whole image,
    #                                    VMEM-resident across its band steps)
    # w_ref:     (9, Cout, Cin)    bf16  tap-major conv weights (kh*3 + kw)
    # scale_ref: (Cout, 1)         f32   folded BN scale
    # shift_ref: (Cout, 1)         f32   folded BN shift (incl. conv bias)
    # o_ref:     (Cout, band*W)    bf16  this band's lane-dense output block
    # acc_ref:   (Cout, band*W)    f32   VMEM scratch accumulator
    cin = x_ref.shape[-1]

    b = pl.program_id(1)
    row0 = b * band
    if band % 8 == 0:
        row0 = pl.multiple_of(row0, 8)

    # Halo slab covering this band's output rows: padded rows [row0, row0+band+2).
    xb = x_ref[pl.ds(row0, band + 2), :, :]            # (band+2, W+2, Cin)

    acc_ref[...] = jnp.zeros_like(acc_ref)

    # 9 shifted taps.  Each is a bf16 MXU matmul in the transposed
    # orientation (Cout, Cin) x (rows, Cin)^T -> (Cout, rows), accumulated
    # into the f32 VMEM scratch.  rows = band*W is the lane-dense axis, so
    # the final store is a full, unmasked vst of an unpadded block.
    for dy in range(3):
        for dx in range(3):
            patch = xb[dy:dy + band, dx:dx + width, :].reshape(
                band * width, cin)
            acc_ref[...] += lax.dot_general(
                w_ref[dy * 3 + dx], patch,
                dimension_numbers=(((1,), (1,)), ((), ())),
                preferred_element_type=jnp.float32)

    # f32 epilogue (v5e-safe: no bf16 VPU math): folded BatchNorm affine +
    # LeakyReLU(0.1).  Cast to bf16 only at the store.
    y = acc_ref[...] * scale_ref[...] + shift_ref[...]
    y = jnp.where(y > 0, y, 0.1 * y)
    o_ref[...] = y.astype(o_ref.dtype)


# ----------------------------------------------------------------------------
# Tiling / budget helpers.
# ----------------------------------------------------------------------------
def _pick_band(h, w):
    """Output rows per grid step.

    Constraints:
      * h % band == 0           uniform bands
      * band % 8 == 0           sublane-aligned halo slice
      * (band * w) % 128 == 0   lane-dense, unmasked output stores
      * band * w <= 32768       bounded per-step working set
      * band < h when possible  >=2 band steps so both v7x TensorCores get
                                work even at N=1
    Falls back to one band per image (block = full dims) if nothing fits.
    """
    best = None
    for band in range(8, h, 8):
        if h % band or (band * w) % 128 or band * w > 32768:
            continue
        best = band
    return best if best is not None else h


def _vmem_limit_bytes():
    """~3/4 of physical VMEM (48 MiB v7x, 96 MiB v6e/v5e), capped at 100 MiB."""
    try:
        cap = int(pltpu.get_tpu_info().vmem_capacity_bytes)
    except Exception:
        cap = 64 * 1024 * 1024      # conservative (v7x-sized) fallback
    return int(min(cap * 3 // 4, 100 * 1024 * 1024))


# ----------------------------------------------------------------------------
# Wrapper.
# ----------------------------------------------------------------------------
@jax.jit
def littlenet_forward(x_nchw, conv_w, conv_b, bn_gamma, bn_beta,
                      bn_mean, bn_var):
    """Eval-mode Littlenet forward: _forward(x) = LeakyReLU(BN(Conv3x3(x))).

    Returns bf16 NCHW activations (accumulation and the BN/LeakyReLU epilogue
    are f32; cast in the consumer if f32 output is required).
    """
    n, cin, h, w = x_nchw.shape
    cout = conv_w.shape[0]
    eps = 1e-5

    band = _pick_band(h, w)
    nb = h // band

    # Single fused XLA pre-pass over the (small) input: NCHW -> NHWC, spatial
    # halo pad, bf16 MXU operand.
    x_nhwc = jnp.transpose(x_nchw, (0, 2, 3, 1))
    x_halo = jnp.pad(x_nhwc, ((0, 0), (1, 1), (1, 1), (0, 0)))
    x_halo = x_halo.astype(jnp.bfloat16)               # (N, H+2, W+2, Cin)

    # (Cout, Cin, 3, 3) -> (9, Cout, Cin) tap-major bf16 weights (no padding).
    w_taps = jnp.transpose(conv_w, (2, 3, 0, 1)).reshape(9, cout, cin)
    w_taps = w_taps.astype(jnp.bfloat16)

    # Fold conv bias + eval-mode BatchNorm into per-channel scale/shift (f32),
    # shaped (Cout, 1) to broadcast over the lane (spatial) axis.
    scale = (bn_gamma / jnp.sqrt(bn_var + eps)).astype(jnp.float32)
    shift = (scale * (conv_b - bn_mean) + bn_beta).astype(jnp.float32)
    scale2 = scale.reshape(cout, 1)
    shift2 = shift.reshape(cout, 1)

    kernel = functools.partial(_conv_bn_lrelu_kernel, band=band, width=w)

    out_flat = pl.pallas_call(
        kernel,
        out_shape=jax.ShapeDtypeStruct((n, cout, h * w), jnp.bfloat16),
        grid_spec=pltpu.PrefetchScalarGridSpec(
            num_scalar_prefetch=0,
            grid=(n, nb),                     # (image, row-band)
            in_specs=[
                # Whole padded image; constant across band steps of the same
                # image, so it is DMA'd once per image and stays resident.
                pl.BlockSpec((None, h + 2, w + 2, cin),
                             lambda i, b: (i, 0, 0, 0)),
                # Invariant operands: constant index_maps, VMEM-resident.
                pl.BlockSpec((9, cout, cin), lambda i, b: (0, 0, 0)),
                pl.BlockSpec((cout, 1), lambda i, b: (0, 0)),
                pl.BlockSpec((cout, 1), lambda i, b: (0, 0)),
            ],
            # Lane-dense, unpadded bf16 output band: (Cout, band*W).
            out_specs=pl.BlockSpec((None, cout, band * w),
                                   lambda i, b: (i, 0, b)),
            scratch_shapes=[pltpu.VMEM((cout, band * w), jnp.float32)],
        ),
        compiler_params=pltpu.CompilerParams(
            dimension_semantics=("parallel", "parallel"),
            vmem_limit_bytes=_vmem_limit_bytes(),
        ),
    )(x_halo, w_taps, scale2, shift2)

    # Free (layout-preserving) reshape back to NCHW; no slice, no transpose.
    return out_flat.reshape(n, cout, h, w)


# ----------------------------------------------------------------------------
# Pure-JAX reference (same math, f32) for a correctness check.
# ----------------------------------------------------------------------------
def _reference(x_nchw, conv_w, conv_b, bn_gamma, bn_beta, bn_mean, bn_var):
    eps = 1e-5
    y = lax.conv_general_dilated(
        x_nchw, conv_w, window_strides=(1, 1), padding=((1, 1), (1, 1)),
        dimension_numbers=("NCHW", "OIHW", "NCHW"),
        precision=lax.Precision.HIGHEST)
    y = y + conv_b[None, :, None, None]
    scale = bn_gamma / jnp.sqrt(bn_var + eps)
    y = scale[None, :, None, None] * (y - bn_mean[None, :, None, None]) \
        + bn_beta[None, :, None, None]
    return jnp.where(y > 0, y, 0.1 * y)


if __name__ == "__main__":
    key = jax.random.PRNGKey(0)
    kx, kw, kb, kg, kbt, km, kv = jax.random.split(key, 7)

    # Small shapes consistent with an image model: N=2, Cin=4, 16x16, Cout=8.
    N, CIN, H, W, COUT = 2, 4, 16, 16, 8
    x = jax.random.normal(kx, (N, CIN, H, W), dtype=jnp.float32)

    # Deterministic "kaiming-ish" conv weights + BN params (synthetic init).
    fan_in = CIN * 3 * 3
    conv_w = jax.random.normal(kw, (COUT, CIN, 3, 3), jnp.float32) \
        * jnp.sqrt(2.0 / (fan_in * (1.0 + 0.1 ** 2)))
    conv_b = 0.01 * jax.random.normal(kb, (COUT,), jnp.float32)
    bn_gamma = 1.0 + 0.05 * jax.random.normal(kg, (COUT,), jnp.float32)
    bn_beta = 0.05 * jax.random.normal(kbt, (COUT,), jnp.float32)
    bn_mean = 0.1 * jax.random.normal(km, (COUT,), jnp.float32)
    bn_var = jnp.abs(1.0 + 0.1 * jax.random.normal(kv, (COUT,), jnp.float32))

    # Pre-quantize x / conv_w to bf16-representable values so the f32
    # reference and the bf16-operand kernel see identical inputs; the kernel
    # additionally stores bf16 (accumulation is f32 in both), hence the
    # bf16-scale tolerance below.
    xq = x.astype(jnp.bfloat16).astype(jnp.float32)
    wq = conv_w.astype(jnp.bfloat16).astype(jnp.float32)

    out = littlenet_forward(xq, wq, conv_b, bn_gamma, bn_beta,
                            bn_mean, bn_var)
    out = jax.block_until_ready(out)

    ref = _reference(xq, wq, conv_b, bn_gamma, bn_beta, bn_mean, bn_var)
    assert out.shape == (N, COUT, H, W)
    assert out.dtype == jnp.bfloat16
    assert jnp.allclose(out.astype(jnp.float32), ref,
                        atol=1e-2, rtol=1e-2), "mismatch vs reference"

    print("KERNEL_OK")
</pallas_src>

<mosaic_0001>
module attributes {stable_mosaic.version = 11 : i64} {
  func.func @_conv_bn_lrelu_kernel(%arg0: i32, %arg1: i32, %arg2: memref<1x18x18x4xbf16, #tpu.memory_space<vmem>>, %arg3: memref<9x8x4xbf16, #tpu.memory_space<vmem>>, %arg4: memref<8x1xf32, #tpu.memory_space<vmem>>, %arg5: memref<8x1xf32, #tpu.memory_space<vmem>>, %arg6: memref<1x8x128xbf16, #tpu.memory_space<vmem>>, %arg7: memref<8x128xf32, #tpu.memory_space<vmem>>) attributes {dimension_semantics = [#tpu.dimension_semantics<parallel>, #tpu.dimension_semantics<parallel>], iteration_bounds = array<i64: 2, 2>, scalar_prefetch = 0 : i64, scratch_operands = 1 : i64, tpu.core_type = #tpu.core_type<tc>, window_params = [{transform_indices = @transform_0, window_bounds = array<i64: 1, 18, 18, 4>}, {pipeline_mode = #tpu.pipeline_mode<synchronous>, transform_indices = @transform_1, window_bounds = array<i64: 9, 8, 4>}, {pipeline_mode = #tpu.pipeline_mode<synchronous>, transform_indices = @transform_2, window_bounds = array<i64: 8, 1>}, {pipeline_mode = #tpu.pipeline_mode<synchronous>, transform_indices = @transform_3, window_bounds = array<i64: 8, 1>}, {transform_indices = @transform_4, window_bounds = array<i64: 1, 8, 128>}]} {
    %c8_i32 = arith.constant 8 : i32
    %0 = arith.muli %arg1, %c8_i32 : i32
    %1 = tpu.assume_multiple %0, 8 : i32
    %c0 = arith.constant 0 : index
    %2 = arith.index_cast %1 : i32 to index
    %c0_0 = arith.constant 0 : index
    %c0_1 = arith.constant 0 : index
    %3 = vector.load %arg2[%c0, %2, %c0_0, %c0_1] : memref<1x18x18x4xbf16, #tpu.memory_space<vmem>>, vector<1x10x18x4xbf16>
    %4 = vector.shape_cast %3 : vector<1x10x18x4xbf16> to vector<10x18x4xbf16>
    %cst = arith.constant 0.000000e+00 : f32
    %5 = vector.broadcast %cst : f32 to vector<8x128xf32>
    %c0_2 = arith.constant 0 : index
    %c0_3 = arith.constant 0 : index
    %6 = vector.load %arg7[%c0_2, %c0_3] : memref<8x128xf32, #tpu.memory_space<vmem>>, vector<8x128xf32>
    tpu.vector_store %arg7[%c0_2, %c0_3], %5 {strides = array<i32>} : memref<8x128xf32, #tpu.memory_space<vmem>>, vector<8x128xf32>,
    %7 = vector.extract_strided_slice %4 {offsets = [0, 0, 0], sizes = [8, 16, 4], strides = [1, 1, 1]} : vector<10x18x4xbf16> to vector<8x16x4xbf16>
    %8 = vector.shape_cast %7 : vector<8x16x4xbf16> to vector<128x4xbf16>
    %c0_4 = arith.constant 0 : index
    %c0_5 = arith.constant 0 : index
    %9 = vector.load %arg7[%c0_4, %c0_5] : memref<8x128xf32, #tpu.memory_space<vmem>>, vector<8x128xf32>
    %c0_6 = arith.constant 0 : index
    %c0_7 = arith.constant 0 : index
    %c0_8 = arith.constant 0 : index
    %10 = vector.load %arg3[%c0_6, %c0_7, %c0_8] : memref<9x8x4xbf16, #tpu.memory_space<vmem>>, vector<1x8x4xbf16>
    %11 = vector.shape_cast %10 : vector<1x8x4xbf16> to vector<8x4xbf16>
    %cst_9 = arith.constant dense<0.000000e+00> : vector<8x128xf32>
    %12 = tpu.matmul %11, %8, %cst_9 {dimension_numbers = #tpu.dot_dimension_numbers<[1], [1], [0], [0], [0, 0, 1, 0], [], []>} : vector<8x4xbf16>, vector<128x4xbf16>, vector<8x128xf32> -> vector<8x128xf32>
    %13 = arith.addf %9, %12 : vector<8x128xf32>
    %c0_10 = arith.constant 0 : index
    %c0_11 = arith.constant 0 : index
    %14 = vector.load %arg7[%c0_10, %c0_11] : memref<8x128xf32, #tpu.memory_space<vmem>>, vector<8x128xf32>
    tpu.vector_store %arg7[%c0_10, %c0_11], %13 {strides = array<i32>} : memref<8x128xf32, #tpu.memory_space<vmem>>, vector<8x128xf32>,
    %15 = vector.extract_strided_slice %4 {offsets = [0, 1, 0], sizes = [8, 16, 4], strides = [1, 1, 1]} : vector<10x18x4xbf16> to vector<8x16x4xbf16>
    %16 = vector.shape_cast %15 : vector<8x16x4xbf16> to vector<128x4xbf16>
    %c0_12 = arith.constant 0 : index
    %c0_13 = arith.constant 0 : index
    %17 = vector.load %arg7[%c0_12, %c0_13] : memref<8x128xf32, #tpu.memory_space<vmem>>, vector<8x128xf32>
    %c1 = arith.constant 1 : index
    %c0_14 = arith.constant 0 : index
    %c0_15 = arith.constant 0 : index
    %18 = vector.load %arg3[%c1, %c0_14, %c0_15] : memref<9x8x4xbf16, #tpu.memory_space<vmem>>, vector<1x8x4xbf16>
    %19 = vector.shape_cast %18 : vector<1x8x4xbf16> to vector<8x4xbf16>
    %cst_16 = arith.constant dense<0.000000e+00> : vector<8x128xf32>
    %20 = tpu.matmul %19, %16, %cst_16 {dimension_numbers = #tpu.dot_dimension_numbers<[1], [1], [0], [0], [0, 0, 1, 0], [], []>} : vector<8x4xbf16>, vector<128x4xbf16>, vector<8x128xf32> -> vector<8x128xf32>
    %21 = arith.addf %17, %20 : vector<8x128xf32>
    %c0_17 = arith.constant 0 : index
    %c0_18 = arith.constant 0 : index
    %22 = vector.load %arg7[%c0_17, %c0_18] : memref<8x128xf32, #tpu.memory_space<vmem>>, vector<8x128xf32>
    tpu.vector_store %arg7[%c0_17, %c0_18], %21 {strides = array<i32>} : memref<8x128xf32, #tpu.memory_space<vmem>>, vector<8x128xf32>,
    %23 = vector.extract_strided_slice %4 {offsets = [0, 2, 0], sizes = [8, 16, 4], strides = [1, 1, 1]} : vector<10x18x4xbf16> to vector<8x16x4xbf16>
    %24 = vector.shape_cast %23 : vector<8x16x4xbf16> to vector<128x4xbf16>
    %c0_19 = arith.constant 0 : index
    %c0_20 = arith.constant 0 : index
    %25 = vector.load %arg7[%c0_19, %c0_20] : memref<8x128xf32, #tpu.memory_space<vmem>>, vector<8x128xf32>
    %c2 = arith.constant 2 : index
    %c0_21 = arith.constant 0 : index
    %c0_22 = arith.constant 0 : index
    %26 = vector.load %arg3[%c2, %c0_21, %c0_22] : memref<9x8x4xbf16, #tpu.memory_space<vmem>>, vector<1x8x4xbf16>
    %27 = vector.shape_cast %26 : vector<1x8x4xbf16> to vector<8x4xbf16>
    %cst_23 = arith.constant dense<0.000000e+00> : vector<8x128xf32>
    %28 = tpu.matmul %27, %24, %cst_23 {dimension_numbers = #tpu.dot_dimension_numbers<[1], [1], [0], [0], [0, 0, 1, 0], [], []>} : vector<8x4xbf16>, vector<128x4xbf16>, vector<8x128xf32> -> vector<8x128xf32>
    %29 = arith.addf %25, %28 : vector<8x128xf32>
    %c0_24 = arith.constant 0 : index
    %c0_25 = arith.constant 0 : index
    %30 = vector.load %arg7[%c0_24, %c0_25] : memref<8x128xf32, #tpu.memory_space<vmem>>, vector<8x128xf32>
    tpu.vector_store %arg7[%c0_24, %c0_25], %29 {strides = array<i32>} : memref<8x128xf32, #tpu.memory_space<vmem>>, vector<8x128xf32>,
    %31 = vector.extract_strided_slice %4 {offsets = [1, 0, 0], sizes = [8, 16, 4], strides = [1, 1, 1]} : vector<10x18x4xbf16> to vector<8x16x4xbf16>
    %32 = vector.shape_cast %31 : vector<8x16x4xbf16> to vector<128x4xbf16>
    %c0_26 = arith.constant 0 : index
    %c0_27 = arith.constant 0 : index
    %33 = vector.load %arg7[%c0_26, %c0_27] : memref<8x128xf32, #tpu.memory_space<vmem>>, vector<8x128xf32>
    %c3 = arith.constant 3 : index
    %c0_28 = arith.constant 0 : index
    %c0_29 = arith.constant 0 : index
    %34 = vector.load %arg3[%c3, %c0_28, %c0_29] : memref<9x8x4xbf16, #tpu.memory_space<vmem>>, vector<1x8x4xbf16>
    %35 = vector.shape_cast %34 : vector<1x8x4xbf16> to vector<8x4xbf16>
    %cst_30 = arith.constant dense<0.000000e+00> : vector<8x128xf32>
    %36 = tpu.matmul %35, %32, %cst_30 {dimension_numbers = #tpu.dot_dimension_numbers<[1], [1], [0], [0], [0, 0, 1, 0], [], []>} : vector<8x4xbf16>, vector<128x4xbf16>, vector<8x128xf32> -> vector<8x128xf32>
    %37 = arith.addf %33, %36 : vector<8x128xf32>
    %c0_31 = arith.constant 0 : index
    %c0_32 = arith.constant 0 : index
    %38 = vector.load %arg7[%c0_31, %c0_32] : memref<8x128xf32, #tpu.memory_space<vmem>>, vector<8x128xf32>
    tpu.vector_store %arg7[%c0_31, %c0_32], %37 {strides = array<i32>} : memref<8x128xf32, #tpu.memory_space<vmem>>, vector<8x128xf32>,
    %39 = vector.extract_strided_slice %4 {offsets = [1, 1, 0], sizes = [8, 16, 4], strides = [1, 1, 1]} : vector<10x18x4xbf16> to vector<8x16x4xbf16>
    %40 = vector.shape_cast %39 : vector<8x16x4xbf16> to vector<128x4xbf16>
    %c0_33 = arith.constant 0 : index
    %c0_34 = arith.constant 0 : index
    %41 = vector.load %arg7[%c0_33, %c0_34] : memref<8x128xf32, #tpu.memory_space<vmem>>, vector<8x128xf32>
    %c4 = arith.constant 4 : index
    %c0_35 = arith.constant 0 : index
    %c0_36 = arith.constant 0 : index
    %42 = vector.load %arg3[%c4, %c0_35, %c0_36] : memref<9x8x4xbf16, #tpu.memory_space<vmem>>, vector<1x8x4xbf16>
    %43 = vector.shape_cast %42 : vector<1x8x4xbf16> to vector<8x4xbf16>
    %cst_37 = arith.constant dense<0.000000e+00> : vector<8x128xf32>
    %44 = tpu.matmul %43, %40, %cst_37 {dimension_numbers = #tpu.dot_dimension_numbers<[1], [1], [0], [0], [0, 0, 1, 0], [], []>} : vector<8x4xbf16>, vector<128x4xbf16>, vector<8x128xf32> -> vector<8x128xf32>
    %45 = arith.addf %41, %44 : vector<8x128xf32>
    %c0_38 = arith.constant 0 : index
    %c0_39 = arith.constant 0 : index
    %46 = vector.load %arg7[%c0_38, %c0_39] : memref<8x128xf32, #tpu.memory_space<vmem>>, vector<8x128xf32>
    tpu.vector_store %arg7[%c0_38, %c0_39], %45 {strides = array<i32>} : memref<8x128xf32, #tpu.memory_space<vmem>>, vector<8x128xf32>,
    %47 = vector.extract_strided_slice %4 {offsets = [1, 2, 0], sizes = [8, 16, 4], strides = [1, 1, 1]} : vector<10x18x4xbf16> to vector<8x16x4xbf16>
    %48 = vector.shape_cast %47 : vector<8x16x4xbf16> to vector<128x4xbf16>
    %c0_40 = arith.constant 0 : index
    %c0_41 = arith.constant 0 : index
    %49 = vector.load %arg7[%c0_40, %c0_41] : memref<8x128xf32, #tpu.memory_space<vmem>>, vector<8x128xf32>
    %c5 = arith.constant 5 : index
    %c0_42 = arith.constant 0 : index
    %c0_43 = arith.constant 0 : index
    %50 = vector.load %arg3[%c5, %c0_42, %c0_43] : memref<9x8x4xbf16, #tpu.memory_space<vmem>>, vector<1x8x4xbf16>
    %51 = vector.shape_cast %50 : vector<1x8x4xbf16> to vector<8x4xbf16>
    %cst_44 = arith.constant dense<0.000000e+00> : vector<8x128xf32>
    %52 = tpu.matmul %51, %48, %cst_44 {dimension_numbers = #tpu.dot_dimension_numbers<[1], [1], [0], [0], [0, 0, 1, 0], [], []>} : vector<8x4xbf16>, vector<128x4xbf16>, vector<8x128xf32> -> vector<8x128xf32>
    %53 = arith.addf %49, %52 : vector<8x128xf32>
    %c0_45 = arith.constant 0 : index
    %c0_46 = arith.constant 0 : index
    %54 = vector.load %arg7[%c0_45, %c0_46] : memref<8x128xf32, #tpu.memory_space<vmem>>, vector<8x128xf32>
    tpu.vector_store %arg7[%c0_45, %c0_46], %53 {strides = array<i32>} : memref<8x128xf32, #tpu.memory_space<vmem>>, vector<8x128xf32>,
    %55 = vector.extract_strided_slice %4 {offsets = [2, 0, 0], sizes = [8, 16, 4], strides = [1, 1, 1]} : vector<10x18x4xbf16> to vector<8x16x4xbf16>
    %56 = vector.shape_cast %55 : vector<8x16x4xbf16> to vector<128x4xbf16>
    %c0_47 = arith.constant 0 : index
    %c0_48 = arith.constant 0 : index
    %57 = vector.load %arg7[%c0_47, %c0_48] : memref<8x128xf32, #tpu.memory_space<vmem>>, vector<8x128xf32>
    %c6 = arith.constant 6 : index
    %c0_49 = arith.constant 0 : index
    %c0_50 = arith.constant 0 : index
    %58 = vector.load %arg3[%c6, %c0_49, %c0_50] : memref<9x8x4xbf16, #tpu.memory_space<vmem>>, vector<1x8x4xbf16>
    %59 = vector.shape_cast %58 : vector<1x8x4xbf16> to vector<8x4xbf16>
    %cst_51 = arith.constant dense<0.000000e+00> : vector<8x128xf32>
    %60 = tpu.matmul %59, %56, %cst_51 {dimension_numbers = #tpu.dot_dimension_numbers<[1], [1], [0], [0], [0, 0, 1, 0], [], []>} : vector<8x4xbf16>, vector<128x4xbf16>, vector<8x128xf32> -> vector<8x128xf32>
    %61 = arith.addf %57, %60 : vector<8x128xf32>
    %c0_52 = arith.constant 0 : index
    %c0_53 = arith.constant 0 : index
    %62 = vector.load %arg7[%c0_52, %c0_53] : memref<8x128xf32, #tpu.memory_space<vmem>>, vector<8x128xf32>
    tpu.vector_store %arg7[%c0_52, %c0_53], %61 {strides = array<i32>} : memref<8x128xf32, #tpu.memory_space<vmem>>, vector<8x128xf32>,
    %63 = vector.extract_strided_slice %4 {offsets = [2, 1, 0], sizes = [8, 16, 4], strides = [1, 1, 1]} : vector<10x18x4xbf16> to vector<8x16x4xbf16>
    %64 = vector.shape_cast %63 : vector<8x16x4xbf16> to vector<128x4xbf16>
    %c0_54 = arith.constant 0 : index
    %c0_55 = arith.constant 0 : index
    %65 = vector.load %arg7[%c0_54, %c0_55] : memref<8x128xf32, #tpu.memory_space<vmem>>, vector<8x128xf32>
    %c7 = arith.constant 7 : index
    %c0_56 = arith.constant 0 : index
    %c0_57 = arith.constant 0 : index
    %66 = vector.load %arg3[%c7, %c0_56, %c0_57] : memref<9x8x4xbf16, #tpu.memory_space<vmem>>, vector<1x8x4xbf16>
    %67 = vector.shape_cast %66 : vector<1x8x4xbf16> to vector<8x4xbf16>
    %cst_58 = arith.constant dense<0.000000e+00> : vector<8x128xf32>
    %68 = tpu.matmul %67, %64, %cst_58 {dimension_numbers = #tpu.dot_dimension_numbers<[1], [1], [0], [0], [0, 0, 1, 0], [], []>} : vector<8x4xbf16>, vector<128x4xbf16>, vector<8x128xf32> -> vector<8x128xf32>
    %69 = arith.addf %65, %68 : vector<8x128xf32>
    %c0_59 = arith.constant 0 : index
    %c0_60 = arith.constant 0 : index
    %70 = vector.load %arg7[%c0_59, %c0_60] : memref<8x128xf32, #tpu.memory_space<vmem>>, vector<8x128xf32>
    tpu.vector_store %arg7[%c0_59, %c0_60], %69 {strides = array<i32>} : memref<8x128xf32, #tpu.memory_space<vmem>>, vector<8x128xf32>,
    %71 = vector.extract_strided_slice %4 {offsets = [2, 2, 0], sizes = [8, 16, 4], strides = [1, 1, 1]} : vector<10x18x4xbf16> to vector<8x16x4xbf16>
    %72 = vector.shape_cast %71 : vector<8x16x4xbf16> to vector<128x4xbf16>
    %c0_61 = arith.constant 0 : index
    %c0_62 = arith.constant 0 : index
    %73 = vector.load %arg7[%c0_61, %c0_62] : memref<8x128xf32, #tpu.memory_space<vmem>>, vector<8x128xf32>
    %c8 = arith.constant 8 : index
    %c0_63 = arith.constant 0 : index
    %c0_64 = arith.constant 0 : index
    %74 = vector.load %arg3[%c8, %c0_63, %c0_64] : memref<9x8x4xbf16, #tpu.memory_space<vmem>>, vector<1x8x4xbf16>
    %75 = vector.shape_cast %74 : vector<1x8x4xbf16> to vector<8x4xbf16>
    %cst_65 = arith.constant dense<0.000000e+00> : vector<8x128xf32>
    %76 = tpu.matmul %75, %72, %cst_65 {dimension_numbers = #tpu.dot_dimension_numbers<[1], [1], [0], [0], [0, 0, 1, 0], [], []>} : vector<8x4xbf16>, vector<128x4xbf16>, vector<8x128xf32> -> vector<8x128xf32>
    %77 = arith.addf %73, %76 : vector<8x128xf32>
    %c0_66 = arith.constant 0 : index
    %c0_67 = arith.constant 0 : index
    %78 = vector.load %arg7[%c0_66, %c0_67] : memref<8x128xf32, #tpu.memory_space<vmem>>, vector<8x128xf32>
    tpu.vector_store %arg7[%c0_66, %c0_67], %77 {strides = array<i32>} : memref<8x128xf32, #tpu.memory_space<vmem>>, vector<8x128xf32>,
    %c0_68 = arith.constant 0 : index
    %c0_69 = arith.constant 0 : index
    %79 = vector.load %arg7[%c0_68, %c0_69] : memref<8x128xf32, #tpu.memory_space<vmem>>, vector<8x128xf32>
    %c0_70 = arith.constant 0 : index
    %c0_71 = arith.constant 0 : index
    %80 = vector.load %arg4[%c0_70, %c0_71] : memref<8x1xf32, #tpu.memory_space<vmem>>, vector<8x1xf32>
    %81 = vector.broadcast %80 : vector<8x1xf32> to vector<8x128xf32>
    %82 = arith.mulf %79, %81 : vector<8x128xf32>
    %c0_72 = arith.constant 0 : index
    %c0_73 = arith.constant 0 : index
    %83 = vector.load %arg5[%c0_72, %c0_73] : memref<8x1xf32, #tpu.memory_space<vmem>>, vector<8x1xf32>
    %84 = vector.broadcast %83 : vector<8x1xf32> to vector<8x128xf32>
    %85 = arith.addf %82, %84 : vector<8x128xf32>
    %cst_74 = arith.constant 0.000000e+00 : f32
    %86 = vector.broadcast %cst_74 : f32 to vector<8x128xf32>
    %87 = arith.cmpf ogt, %85, %86 : vector<8x128xf32>
    %cst_75 = arith.constant 1.000000e-01 : f32
    %88 = vector.broadcast %cst_75 : f32 to vector<8x128xf32>
    %89 = arith.mulf %88, %85 : vector<8x128xf32>
    %90 = arith.select %87, %85, %89 : vector<8x128xi1>, vector<8x128xf32>
    %91 = arith.truncf %90 : vector<8x128xf32> to vector<8x128xbf16>
    %c0_76 = arith.constant 0 : index
    %c0_77 = arith.constant 0 : index
    %c0_78 = arith.constant 0 : index
    %92 = vector.load %arg6[%c0_76, %c0_77, %c0_78] : memref<1x8x128xbf16, #tpu.memory_space<vmem>>, vector<1x8x128xbf16>
    %93 = vector.shape_cast %92 : vector<1x8x128xbf16> to vector<8x128xbf16>
    %94 = vector.shape_cast %91 : vector<8x128xbf16> to vector<1x8x128xbf16>
    tpu.vector_store %arg6[%c0_76, %c0_77, %c0_78], %94 {strides = array<i32>} : memref<1x8x128xbf16, #tpu.memory_space<vmem>>, vector<1x8x128xbf16>,
    return
  }
  func.func @transform_0(%arg0: i32, %arg1: i32) -> (i32, i32, i32, i32) {
    %c0_i32 = arith.constant 0 : i32
    %c0_i32_0 = arith.constant 0 : i32
    %c0_i32_1 = arith.constant 0 : i32
    %c0_i32_2 = arith.constant 0 : i32
    return %arg0, %c0_i32, %c0_i32_0, %c0_i32_1 : i32, i32, i32, i32
  }
  func.func @transform_1(%arg0: i32, %arg1: i32) -> (i32, i32, i32) {
    %c0_i32 = arith.constant 0 : i32
    %c0_i32_0 = arith.constant 0 : i32
    %c0_i32_1 = arith.constant 0 : i32
    %c0_i32_2 = arith.constant 0 : i32
    return %c0_i32, %c0_i32_0, %c0_i32_1 : i32, i32, i32
  }
  func.func @transform_2(%arg0: i32, %arg1: i32) -> (i32, i32) {
    %c0_i32 = arith.constant 0 : i32
    %c0_i32_0 = arith.constant 0 : i32
    %c0_i32_1 = arith.constant 0 : i32
    return %c0_i32, %c0_i32_0 : i32, i32
  }
  func.func @transform_3(%arg0: i32, %arg1: i32) -> (i32, i32) {
    %c0_i32 = arith.constant 0 : i32
    %c0_i32_0 = arith.constant 0 : i32
    %c0_i32_1 = arith.constant 0 : i32
    return %c0_i32, %c0_i32_0 : i32, i32
  }
  func.func @transform_4(%arg0: i32, %arg1: i32) -> (i32, i32, i32) {
    %c0_i32 = arith.constant 0 : i32
    %c0_i32_0 = arith.constant 0 : i32
    return %arg0, %c0_i32, %arg1 : i32, i32, i32
  }
}

</mosaic_0001>

<llo_original>
// kernel: littlenet_forward.1
$region0: #{littlenet_forward.1}
  #allocation0 [shape = 'u32[]', space=smem, size = 0x4, offset = 0x4, fixed_abs, tag = 'smem constant byte address 0x4 - core index']
  #allocation1 [shape = 'u32[144,128]{1,0:T(1,128)}', space=vmem, size = 0x12000, scoped, tag = 'internal scratch']
  #allocation2 [shape = 'f32[8,128]{1,0:T(8,128)}', space=vmem, size = 0x1000, scoped, tag = 'scratch operand']
  %s0 = inlined_call_operand.vmem [shape: bf16[2,18,18,4], index: 0, kind: input, shape index: {}]
  %s1 = inlined_call_operand.vmem [shape: bf16[9,8,4], index: 1, kind: input, shape index: {}]
  %s2 = inlined_call_operand.vmem [shape: f32[8,1], index: 2, kind: input, shape index: {}]
  %s3 = inlined_call_operand.vmem [shape: f32[8,1], index: 3, kind: input, shape index: {}]
  %s4 = inlined_call_operand.vmem [shape: bf16[2,8,256], index: 4, kind: output, shape index: {}]
  %s5 = sld [smem:[#allocation0]]
  $region49: #{littlenet_forward.1} parent=0
    _
  %s7 = ssub.s32 1, %s5
  %s8 = scalar_select 0, %s7, %s5
  loop: start=0, step=1, limit=6
  $region2: #{littlenet_forward.1} parent=0 // loop_pre_header
    _
  $region3: #{littlenet_forward.1} parent=0 // loop_header
    %s10 = sphi 0, %s14
    %p11 = scmp.ge.s32.totalorder %s10, 6
    %s17 = sphi 0, %s29
    %s18 = sphi 0, %s25
    %s19 = sphi 0, %s17
    %s20 = sphi 0, %s18
    %s21 = sphi 0, %s19
    %s22 = sphi 0, %s20
    %s32 = sphi 0, %s34
    %s35 = sphi 0, %s32
    %s36 = sphi 0, %s35
    %s52 = sphi 0, %s36
    %s56 = sphi 0, %s56
    %s58 = sphi 0, %s56
    %s59 = sphi 0, %s58
    %s73 = sphi 0, %s59
    %s77 = sphi 0, %s77
    %s79 = sphi 0, %s77
    %s80 = sphi 0, %s79
    %s94 = sphi 0, %s80
    %s98 = sphi 0, %s98
    %s100 = sphi 0, %s98
    %s101 = sphi 0, %s100
    %s115 = sphi 0, %s101
    %s123 = sphi 0, %s125
    %s126 = sphi 0, %s123
    %s127 = sphi 0, %s126
    %s143 = sphi 0, %s127
  $region4: #{littlenet_forward.1} parent=0 // loop_header_branch
    %13 = sbr.rel (%p11) target = $region8
  $region5: #{littlenet_forward.1} parent=0 // loop_body
    %s15 = ssub.s32 %s10, 1
    %s16 = ssub.s32 %s10, 2
    %s23 = sadd.s32 1, %s18
    %p24 = scmp.ge.s32.totalorder %s23, 2
    %s25 = scalar_select %p24, 0, %s23
    %s26 = sadd.s32 1, %s17
    %s27 = scalar_select %p24, %s26, %s17
    %p28 = scmp.ge.s32.totalorder %s27, 2
    %s29 = scalar_select %p28, 0, %s27
    %s30 = ssub.s32 %s17, %s29
    %p31 = scmp.eq.s32.totalorder %s30, 0
    %s33 = sadd.s32 %s32, 1
    %s34 = scalar_select %p31, %s32, %s33
    %p37 = pneg %p31
    %p38 = scmp.eq.s32.totalorder %s10, 3
    %p39 = por %p37, %p38
    %p40 = scmp.ne.s32.totalorder %s32, %s35
    %p41 = scmp.eq.s32.totalorder %s10, 0
    %p42 = por %p40, %p41
    %p43 = scmp.ne.s32.totalorder %s32, %s35
    %p44 = scmp.eq.s32.totalorder %s15, 3
    %p45 = por %p43, %p44
    %p46 = scmp.ne.s32.totalorder %s35, %s36
    %p47 = scmp.eq.s32.totalorder %s15, 0
    %p48 = por %p46, %p47
    %p49 = scmp.ne.s32.totalorder %s35, %s36
    %p50 = scmp.eq.s32.totalorder %s16, 3
    %p51 = por %p49, %p50
    %p53 = scmp.ne.s32.totalorder %s36, %s52
    %p54 = scmp.eq.s32.totalorder %s16, 0
    %p55 = por %p53, %p54
    %s57 = sadd.s32 %s56, 1
    %p60 = scmp.eq.s32.totalorder %s10, 3
    %p61 = scmp.ne.s32.totalorder %s56, %s58
    %p62 = scmp.eq.s32.totalorder %s10, 0
    %p63 = por %p61, %p62
    %p64 = scmp.ne.s32.totalorder %s56, %s58
    %p65 = scmp.eq.s32.totalorder %s15, 3
    %p66 = por %p64, %p65
    %p67 = scmp.ne.s32.totalorder %s58, %s59
    %p68 = scmp.eq.s32.totalorder %s15, 0
    %p69 = por %p67, %p68
    %p70 = scmp.ne.s32.totalorder %s58, %s59
    %p71 = scmp.eq.s32.totalorder %s16, 3
    %p72 = por %p70, %p71
    %p74 = scmp.ne.s32.totalorder %s59, %s73
    %p75 = scmp.eq.s32.totalorder %s16, 0
    %p76 = por %p74, %p75
    %s78 = sadd.s32 %s77, 1
    %p81 = scmp.eq.s32.totalorder %s10, 3
    %p82 = scmp.ne.s32.totalorder %s77, %s79
    %p83 = scmp.eq.s32.totalorder %s10, 0
    %p84 = por %p82, %p83
    %p85 = scmp.ne.s32.totalorder %s77, %s79
    %p86 = scmp.eq.s32.totalorder %s15, 3
    %p87 = por %p85, %p86
    %p88 = scmp.ne.s32.totalorder %s79, %s80
    %p89 = scmp.eq.s32.totalorder %s15, 0
    %p90 = por %p88, %p89
    %p91 = scmp.ne.s32.totalorder %s79, %s80
    %p92 = scmp.eq.s32.totalorder %s16, 3
    %p93 = por %p91, %p92
    %p95 = scmp.ne.s32.totalorder %s80, %s94
    %p96 = scmp.eq.s32.totalorder %s16, 0
    %p97 = por %p95, %p96
    %s99 = sadd.s32 %s98, 1
    %p102 = scmp.eq.s32.totalorder %s10, 3
    %p103 = scmp.ne.s32.totalorder %s98, %s100
    %p104 = scmp.eq.s32.totalorder %s10, 0
    %p105 = por %p103, %p104
    %p106 = scmp.ne.s32.totalorder %s98, %s100
    %p107 = scmp.eq.s32.totalorder %s15, 3
    %p108 = por %p106, %p107
    %p109 = scmp.ne.s32.totalorder %s100, %s101
    %p110 = scmp.eq.s32.totalorder %s15, 0
    %p111 = por %p109, %p110
    %p112 = scmp.ne.s32.totalorder %s100, %s101
    %p113 = scmp.eq.s32.totalorder %s16, 3
    %p114 = por %p112, %p113
    %p116 = scmp.ne.s32.totalorder %s101, %s115
    %p117 = scmp.eq.s32.totalorder %s16, 0
    %p118 = por %p116, %p117
    %s119 = ssub.s32 %s17, %s29
    %s120 = ssub.s32 %s18, %s25
    %s121 = sor.u32 %s119, %s120
    %p122 = scmp.eq.s32.totalorder %s121, 0
    %s124 = sadd.s32 %s123, 1
    %s125 = scalar_select %p122, %s123, %s124
    %p128 = pneg %p122
    %p129 = scmp.eq.s32.totalorder %s10, 3
    %p130 = por %p128, %p129
    %p131 = scmp.ne.s32.totalorder %s123, %s126
    %p132 = scmp.eq.s32.totalorder %s10, 0
    %p133 = por %p131, %p132
    %p134 = scmp.ne.s32.totalorder %s123, %s126
    %p135 = scmp.eq.s32.totalorder %s15, 3
    %p136 = por %p134, %p135
    %p137 = scmp.ne.s32.totalorder %s126, %s127
    %p138 = scmp.eq.s32.totalorder %s15, 0
    %p139 = por %p137, %p138
    %p140 = scmp.ne.s32.totalorder %s126, %s127
    %p141 = scmp.eq.s32.totalorder %s16, 3
    %p142 = por %p140, %p141
    %p144 = scmp.ne.s32.totalorder %s127, %s143
    %p145 = scmp.eq.s32.totalorder %s16, 0
    %p146 = por %p144, %p145
    %p147 = scmp.le.s32.totalorder 1, %s10
    %p148 = scmp.lt.s32.totalorder %s10, 5
    %p149 = pnand %p147, %p148
    %p150 = pneg %p149
    // Predicated region
    $region9: #{littlenet_forward.1} parent=5 // pred_check
      _
    $region10: #{littlenet_forward.1} parent=5 // pred_check_branch
      %152 = sbr.rel (%p149) target = $region12
    $region11: #{littlenet_forward.1} parent=5 // pred_region
      %s153 = ssub.s32 %s10, 1
      // Predicated region
      $region13: #{littlenet_forward.1} parent=11 // pred_check
        %p154 = pneg %p69
      $region14: #{littlenet_forward.1} parent=11 // pred_check_branch
        %156 = sbr.rel (%p154) target = $region16
      $region15: #{littlenet_forward.1} parent=11 // pred_region
        _
      $region16: #{littlenet_forward.1} parent=11 // pred_fallthru
        _
      // Predicated region
      $region17: #{littlenet_forward.1} parent=11 // pred_check
        %p157 = pneg %p90
      $region18: #{littlenet_forward.1} parent=11 // pred_check_branch
        %159 = sbr.rel (%p157) target = $region20
      $region19: #{littlenet_forward.1} parent=11 // pred_region
        _
      $region20: #{littlenet_forward.1} parent=11 // pred_fallthru
        _
      // Predicated region
      $region21: #{littlenet_forward.1} parent=11 // pred_check
        %p160 = pneg %p111
      $region22: #{littlenet_forward.1} parent=11 // pred_check_branch
        %162 = sbr.rel (%p160) target = $region24
      $region23: #{littlenet_forward.1} parent=11 // pred_region
        _
      $region24: #{littlenet_forward.1} parent=11 // pred_fallthru
        _
    $region12: #{littlenet_forward.1} parent=5 // pred_fallthru
      _
    %p163 = scmp.lt.s32.totalorder %s10, 4
    // Predicated region
    $region25: #{littlenet_forward.1} parent=5 // pred_check
      %p164 = pneg %p163
    $region26: #{littlenet_forward.1} parent=5 // pred_check_branch
      %166 = sbr.rel (%p164) target = $region28
    $region27: #{littlenet_forward.1} parent=5 // pred_region
      // Predicated region
      $region29: #{littlenet_forward.1} parent=27 // pred_check
        %p167 = pneg %p42
      $region30: #{littlenet_forward.1} parent=27 // pred_check_branch
        %169 = sbr.rel (%p167) target = $region32
      $region31: #{littlenet_forward.1} parent=27 // pred_region
        %p170 = scmp.lt.s32.totalorder %s17, 1
        %s171 = scalar_select %p170, %s17, 1
        %s172 = smul.addr %s171, 54
        %s173 = smul.addr %s172, 4
        %s174 = scalar_lea.vmem %s0, %s173
      $region32: #{littlenet_forward.1} parent=27 // pred_fallthru
        _
    $region28: #{littlenet_forward.1} parent=5 // pred_fallthru
      _
    %p175 = scmp.le.s32.totalorder 1, %s10
    %p176 = scmp.lt.s32.totalorder %s10, 5
    %p177 = pnand %p175, %p176
    %p178 = pneg %p177
    // Predicated region
    $region33: #{littlenet_forward.1} parent=5 // pred_check
      _
    $region34: #{littlenet_forward.1} parent=5 // pred_check_branch
      %180 = sbr.rel (%p177) target = $region36
    $region35: #{littlenet_forward.1} parent=5 // pred_region
      %s181 = ssub.s32 %s10, 1
      %p182 = scmp.lt.s32.totalorder %s19, 1
      %s183 = scalar_select %p182, %s19, 1
      %s184 = smul.addr %s183, 54
      %s185 = smul.addr %s184, 4
      %s186 = scalar_lea.vmem %s0, %s185
      %p187 = pneg %p48
      %p188 = pneg %p45
      %p189 = pneg %p69
      %p190 = pneg %p66
      %p191 = pneg %p90
      %p192 = pneg %p87
      %p193 = pneg %p111
      %p194 = pneg %p108
      %p195 = pneg %p139
      %p196 = pneg %p136
      %p197 = scmp.lt.s32.totalorder %s19, 1
      %s198 = scalar_select %p197, %s19, 1
      %p199 = scmp.lt.s32.totalorder %s20, 1
      %s200 = scalar_select %p199, %s20, 1
      %s201 = smul.addr %s198, 2
      %s202 = sadd.s32 %s200, %s201
      %s203 = smul.addr %s202, 4
      %s204 = scalar_lea.vmem %s4, %s203
      %p205 = scmp.lt.s32.totalorder %s19, 1
      %s206 = scalar_select %p205, %s19, 1
      %s207 = smul.addr %s206, 54
      %s208 = smul.addr %s207, 4
      %s209 = scalar_lea.vmem %s0, %s208
      %p210 = scmp.lt.s32.totalorder %s19, 1
      %s211 = scalar_select %p210, %s19, 1
      %p212 = scmp.lt.s32.totalorder %s20, 1
      %s213 = scalar_select %p212, %s20, 1
      %s214 = smul.addr %s211, 2
      %s215 = sadd.s32 %s213, %s214
      %s216 = smul.addr %s215, 4
      %s217 = scalar_lea.vmem %s4, %s216
      %s219 = smul.u32 %s20, 8
      %s220 = smul.u32 %s219, 3
      %s221 = smul.addr %s220, 4
      %s222 = scalar_lea.vmem %s209, %s221
      %v223 = vld [vmem:[%s222] sm:$0xf]
      %v224 = vld [vmem:[%s222 + $0x4] sm:$0xf]
      %v225 = vld [vmem:[%s222 + $0x8] sm:$0x1]
      %v226 = vld [vmem:[%s222 + $0xc] sm:$0xf]
      %v227 = vld [vmem:[%s222 + $0x10] sm:$0xf]
      %v228 = vld [vmem:[%s222 + $0x14] sm:$0x1]
      %v229 = vld [vmem:[%s222 + $0x18] sm:$0xf]
      %v230 = vld [vmem:[%s222 + $0x1c] sm:$0xf]
      %v231 = vld [vmem:[%s222 + $0x20] sm:$0x1]
      %v232 = vld [vmem:[%s222 + $0x24] sm:$0xf]
      %v233 = vld [vmem:[%s222 + $0x28] sm:$0xf]
      %v234 = vld [vmem:[%s222 + $0x2c] sm:$0x1]
      %v235 = vld [vmem:[%s222 + $0x30] sm:$0xf]
      %v236 = vld [vmem:[%s222 + $0x34] sm:$0xf]
      %v237 = vld [vmem:[%s222 + $0x38] sm:$0x1]
      %v238 = vld [vmem:[%s222 + $0x3c] sm:$0xf]
      %v239 = vld [vmem:[%s222 + $0x40] sm:$0xf]
      %v240 = vld [vmem:[%s222 + $0x44] sm:$0x1]
      %v241 = vld [vmem:[%s222 + $0x48] sm:$0xf]
      %v242 = vld [vmem:[%s222 + $0x4c] sm:$0xf]
      %v243 = vld [vmem:[%s222 + $0x50] sm:$0x1]
      %v244 = vld [vmem:[%s222 + $0x54] sm:$0xf]
      %v245 = vld [vmem:[%s222 + $0x58] sm:$0xf]
      %v246 = vld [vmem:[%s222 + $0x5c] sm:$0x1]
      %v247 = vld [vmem:[%s222 + $0x60] sm:$0xf]
      %v248 = vld [vmem:[%s222 + $0x64] sm:$0xf]
      %v249 = vld [vmem:[%s222 + $0x68] sm:$0x1]
      %v250 = vld [vmem:[%s222 + $0x6c] sm:$0xf]
      %v251 = vld [vmem:[%s222 + $0x70] sm:$0xf]
      %v252 = vld [vmem:[%s222 + $0x74] sm:$0x1]
      %253 = vst [vmem:[#allocation2] sm:$0xff] 0.0
      %v254 = vld [vmem:[#allocation2] sm:$0xff]
      %v255 = vld [vmem:[%s1] sm:$0xf]
      %v272 = vunpack.c.l.b16 %v223
      %v273 = vunpack.c.l.b16 %v224
      %v274 = vunpack.c.l.b16 %v226
      %v275 = vunpack.c.l.b16 %v227
      %v276 = vunpack.c.l.b16 %v229
      %v277 = vunpack.c.l.b16 %v230
      %v278 = vunpack.c.l.b16 %v232
      %v279 = vunpack.c.l.b16 %v233
      %v280 = vunpack.c.l.b16 %v235
      %v281 = vunpack.c.l.b16 %v236
      %v282 = vunpack.c.l.b16 %v238
      %v283 = vunpack.c.l.b16 %v239
      %v284 = vunpack.c.l.b16 %v241
      %v285 = vunpack.c.l.b16 %v242
      %v286 = vunpack.c.l.b16 %v244
      %v287 = vunpack.c.l.b16 %v245
      %v288 = vpack.c.b16 %v273, %v272
      %v289 = vpack.c.b16 %v275, %v274
      %v290 = vpack.c.b16 %v277, %v276
      %v291 = vpack.c.b16 %v279, %v278
      %v292 = vpack.c.b16 %v281, %v280
      %v293 = vpack.c.b16 %v283, %v282
      %v294 = vpack.c.b16 %v285, %v284
      %v295 = vpack.c.b16 %v287, %v286
      %vm296 = vcmask 31744
      %v298 = vsel %vm296, %v255, 0
      %v301 = vsel %vm296, %v288, 0
      %v304 = vsel %vm296, %v289, 0
      %v307 = vsel %vm296, %v290, 0
      %v310 = vsel %vm296, %v291, 0
      %v313 = vsel %vm296, %v292, 0
      %v316 = vsel %vm296, %v293, 0
      %v319 = vsel %vm296, %v294, 0
      %v322 = vsel %vm296, %v295, 0
      %324 = vmatprep.subr.bf16.mxu0 0
      %325 = vmatpush1.bf16.xpose.msra.mxu0 %v301
      %326 = vmatprep.subr.bf16.mxu0 0
      %327 = vmatpush1.bf16.xpose.msra.mxu0 %v304
      %328 = vmatprep.subr.bf16.mxu0 0
      %329 = vmatpush1.bf16.xpose.msra.mxu0 %v307
      %330 = vmatprep.subr.bf16.mxu0 0
      %331 = vmatpush1.bf16.xpose.msra.mxu0 %v310
      %332 = vmatprep.subr.bf16.mxu0 0
      %333 = vmatpush1.bf16.xpose.msra.mxu0 %v313
      %334 = vmatprep.subr.bf16.mxu0 0
      %335 = vmatpush1.bf16.xpose.msra.mxu0 %v316
      %336 = vmatprep.subr.bf16.mxu0 0
      %337 = vmatpush1.bf16.xpose.msra.mxu0 %v319
      %338 = vmatprep.subr.bf16.mxu0 0
      %339 = vmatpush1.bf16.xpose.msra.mxu0 %v322
      %340 = vmatprep.subr.bf16.mxu0 0
      %341 = vmatpush1.bf16.xpose.msra.mxu0 0
      %342 = vmatprep.subr.bf16.mxu0 0
      %343 = vmatpush1.bf16.xpose.msra.mxu0 0
      %344 = vmatprep.subr.bf16.mxu0 0
      %345 = vmatpush1.bf16.xpose.msra.mxu0 0
      %346 = vmatprep.subr.bf16.mxu0 0
      %347 = vmatpush1.bf16.xpose.msra.mxu0 0
      %348 = vmatprep.subr.bf16.mxu0 0
      %349 = vmatpush1.bf16.xpose.msra.mxu0 0
      %350 = vmatprep.subr.bf16.mxu0 0
      %351 = vmatpush1.bf16.xpose.msra.mxu0 0
      %352 = vmatprep.subr.bf16.mxu0 0
      %353 = vmatpush1.bf16.xpose.msra.mxu0 0
      %354 = vmatprep.subr.bf16.mxu0 0
      %355 = vmatpush1.bf16.xpose.msra.mxu0 0
      %356 = vmatprep.mubr.bf16.mxu0 0
      %357 = vmatmul.mubr.bf16.gmra.mrb[0].mxu0 %v298
      %v358 = vpop.f32.mrb[0].mxu0
      %v359 = vadd.f32 0.0, %v358
      %v360 = vpop.f32.mrb[0].mxu0
      %v361 = vpop.f32.mrb[0].mxu0
      %v362 = vpop.f32.mrb[0].mxu0
      %363 = vdwg.mxu0
      %v364 = vadd.f32 %v254, %v359
      %365 = vst [vmem:[#allocation2] sm:$0xff] %v364
      %vm366 = vsmask.f32 3328
      %vm367 = vsmask.f32 7440
      %vm368 = vmor %vm366, %vm367
      %v370 = vshrl.u32 %v223, 16
      %v372 = vrot.slane %v370, 4
      %v373 = vshll.u32 %v223, 16
      %v375 = vrot.slane %v373, 5
      %v376 = vor.u32 %v372, %v375
      %v377 = vrot.slane %v376, 4
      %v379 = vshll.u32 %v224, 16
      %v381 = vrot.slane %v379, 5
      %v382 = vsel %vm368, %v377, %v381
      %v383 = vshrl.u32 %v224, 16
      %v385 = vrot.slane %v383, 4
      %v386 = vor.u32 %v385, %v381
      %v387 = vrot.slane %v386, 4
      %v389 = vshll.u32 %v225, 16
      %v391 = vrot.slane %v389, 5
      %v392 = vsel %vm368, %v387, %v391
      %v394 = vshrl.u32 %v226, 16
      %v396 = vrot.slane %v394, 4
      %v397 = vshll.u32 %v226, 16
      %v399 = vrot.slane %v397, 5
      %v400 = vor.u32 %v396, %v399
      %v401 = vrot.slane %v400, 4
      %v403 = vshll.u32 %v227, 16
      %v405 = vrot.slane %v403, 5
      %v406 = vsel %vm368, %v401, %v405
      %v407 = vshrl.u32 %v227, 16
      %v409 = vrot.slane %v407, 4
      %v410 = vor.u32 %v409, %v405
      %v411 = vrot.slane %v410, 4
      %v413 = vshll.u32 %v228, 16
      %v415 = vrot.slane %v413, 5
      %v416 = vsel %vm368, %v411, %v415
      %v418 = vshrl.u32 %v229, 16
      %v420 = vrot.slane %v418, 4
      %v421 = vshll.u32 %v229, 16
      %v423 = vrot.slane %v421, 5
      %v424 = vor.u32 %v420, %v423
      %v425 = vrot.slane %v424, 4
      %v427 = vshll.u32 %v230, 16
      %v429 = vrot.slane %v427, 5
      %v430 = vsel %vm368, %v425, %v429
      %v431 = vshrl.u32 %v230, 16
      %v433 = vrot.slane %v431, 4
      %v434 = vor.u32 %v433, %v429
      %v435 = vrot.slane %v434, 4
      %v437 = vshll.u32 %v231, 16
      %v439 = vrot.slane %v437, 5
      %v440 = vsel %vm368, %v435, %v439
      %v442 = vshrl.u32 %v232, 16
      %v444 = vrot.slane %v442, 4
      %v445 = vshll.u32 %v232, 16
      %v447 = vrot.slane %v445, 5
      %v448 = vor.u32 %v444, %v447
      %v449 = vrot.slane %v448, 4
      %v451 = vshll.u32 %v233, 16
      %v453 = vrot.slane %v451, 5
      %v454 = vsel %vm368, %v449, %v453
      %v455 = vshrl.u32 %v233, 16
      %v457 = vrot.slane %v455, 4
      %v458 = vor.u32 %v457, %v453
      %v459 = vrot.slane %v458, 4
      %v461 = vshll.u32 %v234, 16
      %v463 = vrot.slane %v461, 5
      %v464 = vsel %vm368, %v459, %v463
      %v466 = vshrl.u32 %v235, 16
      %v468 = vrot.slane %v466, 4
      %v469 = vshll.u32 %v235, 16
      %v471 = vrot.slane %v469, 5
      %v472 = vor.u32 %v468, %v471
      %v473 = vrot.slane %v472, 4
      %v475 = vshll.u32 %v236, 16
      %v477 = vrot.slane %v475, 5
      %v478 = vsel %vm368, %v473, %v477
      %v479 = vshrl.u32 %v236, 16
      %v481 = vrot.slane %v479, 4
      %v482 = vor.u32 %v481, %v477
      %v483 = vrot.slane %v482, 4
      %v485 = vshll.u32 %v237, 16
      %v487 = vrot.slane %v485, 5
      %v488 = vsel %vm368, %v483, %v487
      %v490 = vshrl.u32 %v238, 16
      %v492 = vrot.slane %v490, 4
      %v493 = vshll.u32 %v238, 16
      %v495 = vrot.slane %v493, 5
      %v496 = vor.u32 %v492, %v495
      %v497 = vrot.slane %v496, 4
      %v499 = vshll.u32 %v239, 16
      %v501 = vrot.slane %v499, 5
      %v502 = vsel %vm368, %v497, %v501
      %v503 = vshrl.u32 %v239, 16
      %v505 = vrot.slane %v503, 4
      %v506 = vor.u32 %v505, %v501
      %v507 = vrot.slane %v506, 4
      %v509 = vshll.u32 %v240, 16
      %v511 = vrot.slane %v509, 5
      %v512 = vsel %vm368, %v507, %v511
      %v514 = vshrl.u32 %v241, 16
      %v516 = vrot.slane %v514, 4
      %v517 = vshll.u32 %v241, 16
      %v519 = vrot.slane %v517, 5
      %v520 = vor.u32 %v516, %v519
      %v521 = vrot.slane %v520, 4
      %v523 = vshll.u32 %v242, 16
      %v525 = vrot.slane %v523, 5
      %v526 = vsel %vm368, %v521, %v525
      %v527 = vshrl.u32 %v242, 16
      %v529 = vrot.slane %v527, 4
      %v530 = vor.u32 %v529, %v525
      %v531 = vrot.slane %v530, 4
      %v533 = vshll.u32 %v243, 16
      %v535 = vrot.slane %v533, 5
      %v536 = vsel %vm368, %v531, %v535
      %v538 = vshrl.u32 %v244, 16
      %v540 = vrot.slane %v538, 4
      %v541 = vshll.u32 %v244, 16
      %v543 = vrot.slane %v541, 5
      %v544 = vor.u32 %v540, %v543
      %v545 = vrot.slane %v544, 4
      %v547 = vshll.u32 %v245, 16
      %v549 = vrot.slane %v547, 5
      %v550 = vsel %vm368, %v545, %v549
      %v551 = vshrl.u32 %v245, 16
      %v553 = vrot.slane %v551, 4
      %v554 = vor.u32 %v553, %v549
      %v555 = vrot.slane %v554, 4
      %v557 = vshll.u32 %v246, 16
      %v559 = vrot.slane %v557, 5
      %v560 = vsel %vm368, %v555, %v559
      %v561 = vld [vmem:[#allocation2] sm:$0xff]
      %s562 = scalar_lea.vmem %s1, 4
      %v563 = vld [vmem:[%s562] sm:$0xf]
      %v564 = vunpack.c.l.b16 %v382
      %v565 = vunpack.c.l.b16 %v392
      %v566 = vunpack.c.l.b16 %v406
      %v567 = vunpack.c.l.b16 %v416
      %v568 = vunpack.c.l.b16 %v430
      %v569 = vunpack.c.l.b16 %v440
      %v570 = vunpack.c.l.b16 %v454
      %v571 = vunpack.c.l.b16 %v464
      %v572 = vunpack.c.l.b16 %v478
      %v573 = vunpack.c.l.b16 %v488
      %v574 = vunpack.c.l.b16 %v502
      %v575 = vunpack.c.l.b16 %v512
      %v576 = vunpack.c.l.b16 %v526
      %v577 = vunpack.c.l.b16 %v536
      %v578 = vunpack.c.l.b16 %v550
      %v579 = vunpack.c.l.b16 %v560
      %v580 = vpack.c.b16 %v565, %v564
      %v581 = vpack.c.b16 %v567, %v566
      %v582 = vpack.c.b16 %v569, %v568
      %v583 = vpack.c.b16 %v571, %v570
      %v584 = vpack.c.b16 %v573, %v572
      %v585 = vpack.c.b16 %v575, %v574
      %v586 = vpack.c.b16 %v577, %v576
      %v587 = vpack.c.b16 %v579, %v578
      %v589 = vsel %vm296, %v563, 0
      %v592 = vsel %vm296, %v580, 0
      %v595 = vsel %vm296, %v581, 0
      %v598 = vsel %vm296, %v582, 0
      %v601 = vsel %vm296, %v583, 0
      %v604 = vsel %vm296, %v584, 0
      %v607 = vsel %vm296, %v585, 0
      %v610 = vsel %vm296, %v586, 0
      %v613 = vsel %vm296, %v587, 0
      %615 = vmatprep.subr.bf16.mxu0 0
      %616 = vmatpush1.bf16.xpose.msra.mxu0 %v592
      %617 = vmatprep.subr.bf16.mxu0 0
      %618 = vmatpush1.bf16.xpose.msra.mxu0 %v595
      %619 = vmatprep.subr.bf16.mxu0 0
      %620 = vmatpush1.bf16.xpose.msra.mxu0 %v598
      %621 = vmatprep.subr.bf16.mxu0 0
      %622 = vmatpush1.bf16.xpose.msra.mxu0 %v601
      %623 = vmatprep.subr.bf16.mxu0 0
      %624 = vmatpush1.bf16.xpose.msra.mxu0 %v604
      %625 = vmatprep.subr.bf16.mxu0 0
      %626 = vmatpush1.bf16.xpose.msra.mxu0 %v607
      %627 = vmatprep.subr.bf16.mxu0 0
      %628 = vmatpush1.bf16.xpose.msra.mxu0 %v610
      %629 = vmatprep.subr.bf16.mxu0 0
      %630 = vmatpush1.bf16.xpose.msra.mxu0 %v613
      %631 = vmatprep.subr.bf16.mxu0 0
      %632 = vmatpush1.bf16.xpose.msra.mxu0 0
      %633 = vmatprep.subr.bf16.mxu0 0
      %634 = vmatpush1.bf16.xpose.msra.mxu0 0
      %635 = vmatprep.subr.bf16.mxu0 0
      %636 = vmatpush1.bf16.xpose.msra.mxu0 0
      %637 = vmatprep.subr.bf16.mxu0 0
      %638 = vmatpush1.bf16.xpose.msra.mxu0 0
      %639 = vmatprep.subr.bf16.mxu0 0
      %640 = vmatpush1.bf16.xpose.msra.mxu0 0
      %641 = vmatprep.subr.bf16.mxu0 0
      %642 = vmatpush1.bf16.xpose.msra.mxu0 0
      %643 = vmatprep.subr.bf16.mxu0 0
      %644 = vmatpush1.bf16.xpose.msra.mxu0 0
      %645 = vmatprep.subr.bf16.mxu0 0
      %646 = vmatpush1.bf16.xpose.msra.mxu0 0
      %647 = vmatprep.mubr.bf16.mxu0 0
      %648 = vmatmul.mubr.bf16.gmra.mrb[0].mxu0 %v589
      %v649 = vpop.f32.mrb[0].mxu0
      %v650 = vadd.f32 0.0, %v649
      %v651 = vpop.f32.mrb[0].mxu0
      %v652 = vpop.f32.mrb[0].mxu0
      %v653 = vpop.f32.mrb[0].mxu0
      %654 = vdwg.mxu0
      %v655 = vadd.f32 %v561, %v650
      %656 = vst [vmem:[#allocation2] sm:$0xff] %v655
      %vm665 = vcmask 1042432
      %vm666 = vcmask 1046532
      %vm667 = vmor %vm665, %vm666
      %v668 = vrot.slane %v223, 5
      %v669 = vrot.slane %v668, 4
      %v670 = vrot.slane %v224, 5
      %v671 = vsel %vm667, %v669, %v670
      %v672 = vrot.slane %v670, 4
      %v673 = vrot.slane %v225, 5
      %v674 = vsel %vm667, %v672, %v673
      %v675 = vrot.slane %v226, 5
      %v676 = vrot.slane %v675, 4
      %v677 = vrot.slane %v227, 5
      %v678 = vsel %vm667, %v676, %v677
      %v679 = vrot.slane %v677, 4
      %v680 = vrot.slane %v228, 5
      %v681 = vsel %vm667, %v679, %v680
      %v682 = vrot.slane %v229, 5
      %v683 = vrot.slane %v682, 4
      %v684 = vrot.slane %v230, 5
      %v685 = vsel %vm667, %v683, %v684
      %v686 = vrot.slane %v684, 4
      %v687 = vrot.slane %v231, 5
      %v688 = vsel %vm667, %v686, %v687
      %v689 = vrot.slane %v232, 5
      %v690 = vrot.slane %v689, 4
      %v691 = vrot.slane %v233, 5
      %v692 = vsel %vm667, %v690, %v691
      %v693 = vrot.slane %v691, 4
      %v694 = vrot.slane %v234, 5
      %v695 = vsel %vm667, %v693, %v694
      %v696 = vrot.slane %v235, 5
      %v697 = vrot.slane %v696, 4
      %v698 = vrot.slane %v236, 5
      %v699 = vsel %vm667, %v697, %v698
      %v700 = vrot.slane %v698, 4
      %v701 = vrot.slane %v237, 5
      %v702 = vsel %vm667, %v700, %v701
      %v703 = vrot.slane %v238, 5
      %v704 = vrot.slane %v703, 4
      %v705 = vrot.slane %v239, 5
      %v706 = vsel %vm667, %v704, %v705
      %v707 = vrot.slane %v705, 4
      %v708 = vrot.slane %v240, 5
      %v709 = vsel %vm667, %v707, %v708
      %v710 = vrot.slane %v241, 5
      %v711 = vrot.slane %v710, 4
      %v712 = vrot.slane %v242, 5
      %v713 = vsel %vm667, %v711, %v712
      %v714 = vrot.slane %v712, 4
      %v715 = vrot.slane %v243, 5
      %v716 = vsel %vm667, %v714, %v715
      %v717 = vrot.slane %v244, 5
      %v718 = vrot.slane %v717, 4
      %v719 = vrot.slane %v245, 5
      %v720 = vsel %vm667, %v718, %v719
      %v721 = vrot.slane %v719, 4
      %v722 = vrot.slane %v246, 5
      %v723 = vsel %vm667, %v721, %v722
      %v724 = vld [vmem:[#allocation2] sm:$0xff]
      %s725 = scalar_lea.vmem %s1, 8
      %v726 = vld [vmem:[%s725] sm:$0xf]
      %v727 = vunpack.c.l.b16 %v671
      %v728 = vunpack.c.l.b16 %v674
      %v729 = vunpack.c.l.b16 %v678
      %v730 = vunpack.c.l.b16 %v681
      %v731 = vunpack.c.l.b16 %v685
      %v732 = vunpack.c.l.b16 %v688
      %v733 = vunpack.c.l.b16 %v692
      %v734 = vunpack.c.l.b16 %v695
      %v735 = vunpack.c.l.b16 %v699
      %v736 = vunpack.c.l.b16 %v702
      %v737 = vunpack.c.l.b16 %v706
      %v738 = vunpack.c.l.b16 %v709
      %v739 = vunpack.c.l.b16 %v713
      %v740 = vunpack.c.l.b16 %v716
      %v741 = vunpack.c.l.b16 %v720
      %v742 = vunpack.c.l.b16 %v723
      %v743 = vpack.c.b16 %v728, %v727
      %v744 = vpack.c.b16 %v730, %v729
      %v745 = vpack.c.b16 %v732, %v731
      %v746 = vpack.c.b16 %v734, %v733
      %v747 = vpack.c.b16 %v736, %v735
      %v748 = vpack.c.b16 %v738, %v737
      %v749 = vpack.c.b16 %v740, %v739
      %v750 = vpack.c.b16 %v742, %v741
      %v752 = vsel %vm296, %v726, 0
      %v755 = vsel %vm296, %v743, 0
      %v758 = vsel %vm296, %v744, 0
      %v761 = vsel %vm296, %v745, 0
      %v764 = vsel %vm296, %v746, 0
      %v767 = vsel %vm296, %v747, 0
      %v770 = vsel %vm296, %v748, 0
      %v773 = vsel %vm296, %v749, 0
      %v776 = vsel %vm296, %v750, 0
      %778 = vmatprep.subr.bf16.mxu0 0
      %779 = vmatpush1.bf16.xpose.msra.mxu0 %v755
      %780 = vmatprep.subr.bf16.mxu0 0
      %781 = vmatpush1.bf16.xpose.msra.mxu0 %v758
      %782 = vmatprep.subr.bf16.mxu0 0
      %783 = vmatpush1.bf16.xpose.msra.mxu0 %v761
      %784 = vmatprep.subr.bf16.mxu0 0
      %785 = vmatpush1.bf16.xpose.msra.mxu0 %v764
      %786 = vmatprep.subr.bf16.mxu0 0
      %787 = vmatpush1.bf16.xpose.msra.mxu0 %v767
      %788 = vmatprep.subr.bf16.mxu0 0
      %789 = vmatpush1.bf16.xpose.msra.mxu0 %v770
      %790 = vmatprep.subr.bf16.mxu0 0
      %791 = vmatpush1.bf16.xpose.msra.mxu0 %v773
      %792 = vmatprep.subr.bf16.mxu0 0
      %793 = vmatpush1.bf16.xpose.msra.mxu0 %v776
      %794 = vmatprep.subr.bf16.mxu0 0
      %795 = vmatpush1.bf16.xpose.msra.mxu0 0
      %796 = vmatprep.subr.bf16.mxu0 0
      %797 = vmatpush1.bf16.xpose.msra.mxu0 0
      %798 = vmatprep.subr.bf16.mxu0 0
      %799 = vmatpush1.bf16.xpose.msra.mxu0 0
      %800 = vmatprep.subr.bf16.mxu0 0
      %801 = vmatpush1.bf16.xpose.msra.mxu0 0
      %802 = vmatprep.subr.bf16.mxu0 0
      %803 = vmatpush1.bf16.xpose.msra.mxu0 0
      %804 = vmatprep.subr.bf16.mxu0 0
      %805 = vmatpush1.bf16.xpose.msra.mxu0 0
      %806 = vmatprep.subr.bf16.mxu0 0
      %807 = vmatpush1.bf16.xpose.msra.mxu0 0
      %808 = vmatprep.subr.bf16.mxu0 0
      %809 = vmatpush1.bf16.xpose.msra.mxu0 0
      %810 = vmatprep.mubr.bf16.mxu0 0
      %811 = vmatmul.mubr.bf16.gmra.mrb[0].mxu0 %v752
      %v812 = vpop.f32.mrb[0].mxu0
      %v813 = vadd.f32 0.0, %v812
      %v814 = vpop.f32.mrb[0].mxu0
      %v815 = vpop.f32.mrb[0].mxu0
      %v816 = vpop.f32.mrb[0].mxu0
      %817 = vdwg.mxu0
      %v818 = vadd.f32 %v724, %v813
      %819 = vst [vmem:[#allocation2] sm:$0xff] %v818
      %v820 = vld [vmem:[#allocation2] sm:$0xff]
      %s821 = scalar_lea.vmem %s1, 12
      %v822 = vld [vmem:[%s821] sm:$0xf]
      %v825 = vunpack.c.l.b16 %v247
      %v826 = vunpack.c.l.b16 %v248
      %v827 = vpack.c.b16 %v826, %v825
      %v829 = vsel %vm296, %v822, 0
      %v832 = vsel %vm296, %v827, 0
      %834 = vmatprep.subr.bf16.mxu0 0
      %835 = vmatpush1.bf16.xpose.msra.mxu0 %v304
      %836 = vmatprep.subr.bf16.mxu0 0
      %837 = vmatpush1.bf16.xpose.msra.mxu0 %v307
      %838 = vmatprep.subr.bf16.mxu0 0
      %839 = vmatpush1.bf16.xpose.msra.mxu0 %v310
      %840 = vmatprep.subr.bf16.mxu0 0
      %841 = vmatpush1.bf16.xpose.msra.mxu0 %v313
      %842 = vmatprep.subr.bf16.mxu0 0
      %843 = vmatpush1.bf16.xpose.msra.mxu0 %v316
      %844 = vmatprep.subr.bf16.mxu0 0
      %845 = vmatpush1.bf16.xpose.msra.mxu0 %v319
      %846 = vmatprep.subr.bf16.mxu0 0
      %847 = vmatpush1.bf16.xpose.msra.mxu0 %v322
      %848 = vmatprep.subr.bf16.mxu0 0
      %849 = vmatpush1.bf16.xpose.msra.mxu0 %v832
      %850 = vmatprep.subr.bf16.mxu0 0
      %851 = vmatpush1.bf16.xpose.msra.mxu0 0
      %852 = vmatprep.subr.bf16.mxu0 0
      %853 = vmatpush1.bf16.xpose.msra.mxu0 0
      %854 = vmatprep.subr.bf16.mxu0 0
      %855 = vmatpush1.bf16.xpose.msra.mxu0 0
      %856 = vmatprep.subr.bf16.mxu0 0
      %857 = vmatpush1.bf16.xpose.msra.mxu0 0
      %858 = vmatprep.subr.bf16.mxu0 0
      %859 = vmatpush1.bf16.xpose.msra.mxu0 0
      %860 = vmatprep.subr.bf16.mxu0 0
      %861 = vmatpush1.bf16.xpose.msra.mxu0 0
      %862 = vmatprep.subr.bf16.mxu0 0
      %863 = vmatpush1.bf16.xpose.msra.mxu0 0
      %864 = vmatprep.subr.bf16.mxu0 0
      %865 = vmatpush1.bf16.xpose.msra.mxu0 0
      %866 = vmatprep.mubr.bf16.mxu0 0
      %867 = vmatmul.mubr.bf16.gmra.mrb[0].mxu0 %v829
      %v868 = vpop.f32.mrb[0].mxu0
      %v869 = vadd.f32 0.0, %v868
      %v870 = vpop.f32.mrb[0].mxu0
      %v871 = vpop.f32.mrb[0].mxu0
      %v872 = vpop.f32.mrb[0].mxu0
      %873 = vdwg.mxu0
      %v874 = vadd.f32 %v820, %v869
      %875 = vst [vmem:[#allocation2] sm:$0xff] %v874
      %v877 = vshrl.u32 %v247, 16
      %v879 = vrot.slane %v877, 4
      %v880 = vshll.u32 %v247, 16
      %v882 = vrot.slane %v880, 5
      %v883 = vor.u32 %v879, %v882
      %v884 = vrot.slane %v883, 4
      %v886 = vshll.u32 %v248, 16
      %v888 = vrot.slane %v886, 5
      %v889 = vsel %vm368, %v884, %v888
      %v890 = vshrl.u32 %v248, 16
      %v892 = vrot.slane %v890, 4
      %v893 = vor.u32 %v892, %v888
      %v894 = vrot.slane %v893, 4
      %v896 = vshll.u32 %v249, 16
      %v898 = vrot.slane %v896, 5
      %v899 = vsel %vm368, %v894, %v898
      %v900 = vld [vmem:[#allocation2] sm:$0xff]
      %s901 = scalar_lea.vmem %s1, 16
      %v902 = vld [vmem:[%s901] sm:$0xf]
      %v903 = vunpack.c.l.b16 %v889
      %v904 = vunpack.c.l.b16 %v899
      %v905 = vpack.c.b16 %v904, %v903
      %v907 = vsel %vm296, %v902, 0
      %v910 = vsel %vm296, %v905, 0
      %912 = vmatprep.subr.bf16.mxu0 0
      %913 = vmatpush1.bf16.xpose.msra.mxu0 %v595
      %914 = vmatprep.subr.bf16.mxu0 0
      %915 = vmatpush1.bf16.xpose.msra.mxu0 %v598
      %916 = vmatprep.subr.bf16.mxu0 0
      %917 = vmatpush1.bf16.xpose.msra.mxu0 %v601
      %918 = vmatprep.subr.bf16.mxu0 0
      %919 = vmatpush1.bf16.xpose.msra.mxu0 %v604
      %920 = vmatprep.subr.bf16.mxu0 0
      %921 = vmatpush1.bf16.xpose.msra.mxu0 %v607
      %922 = vmatprep.subr.bf16.mxu0 0
      %923 = vmatpush1.bf16.xpose.msra.mxu0 %v610
      %924 = vmatprep.subr.bf16.mxu0 0
      %925 = vmatpush1.bf16.xpose.msra.mxu0 %v613
      %926 = vmatprep.subr.bf16.mxu0 0
      %927 = vmatpush1.bf16.xpose.msra.mxu0 %v910
      %928 = vmatprep.subr.bf16.mxu0 0
      %929 = vmatpush1.bf16.xpose.msra.mxu0 0
      %930 = vmatprep.subr.bf16.mxu0 0
      %931 = vmatpush1.bf16.xpose.msra.mxu0 0
      %932 = vmatprep.subr.bf16.mxu0 0
      %933 = vmatpush1.bf16.xpose.msra.mxu0 0
      %934 = vmatprep.subr.bf16.mxu0 0
      %935 = vmatpush1.bf16.xpose.msra.mxu0 0
      %936 = vmatprep.subr.bf16.mxu0 0
      %937 = vmatpush1.bf16.xpose.msra.mxu0 0
      %938 = vmatprep.subr.bf16.mxu0 0
      %939 = vmatpush1.bf16.xpose.msra.mxu0 0
      %940 = vmatprep.subr.bf16.mxu0 0
      %941 = vmatpush1.bf16.xpose.msra.mxu0 0
      %942 = vmatprep.subr.bf16.mxu0 0
      %943 = vmatpush1.bf16.xpose.msra.mxu0 0
      %944 = vmatprep.mubr.bf16.mxu0 0
      %945 = vmatmul.mubr.bf16.gmra.mrb[0].mxu0 %v907
      %v946 = vpop.f32.mrb[0].mxu0
      %v947 = vadd.f32 0.0, %v946
      %v948 = vpop.f32.mrb[0].mxu0
      %v949 = vpop.f32.mrb[0].mxu0
      %v950 = vpop.f32.mrb[0].mxu0
      %951 = vdwg.mxu0
      %v952 = vadd.f32 %v900, %v947
      %953 = vst [vmem:[#allocation2] sm:$0xff] %v952
      %v955 = vrot.slane %v247, 5
      %v956 = vrot.slane %v955, 4
      %v957 = vrot.slane %v248, 5
      %v958 = vsel %vm667, %v956, %v957
      %v959 = vrot.slane %v957, 4
      %v960 = vrot.slane %v249, 5
      %v961 = vsel %vm667, %v959, %v960
      %v962 = vld [vmem:[#allocation2] sm:$0xff]
      %s963 = scalar_lea.vmem %s1, 20
      %v964 = vld [vmem:[%s963] sm:$0xf]
      %v965 = vunpack.c.l.b16 %v958
      %v966 = vunpack.c.l.b16 %v961
      %v967 = vpack.c.b16 %v966, %v965
      %v969 = vsel %vm296, %v964, 0
      %v972 = vsel %vm296, %v967, 0
      %974 = vmatprep.subr.bf16.mxu0 0
      %975 = vmatpush1.bf16.xpose.msra.mxu0 %v758
      %976 = vmatprep.subr.bf16.mxu0 0
      %977 = vmatpush1.bf16.xpose.msra.mxu0 %v761
      %978 = vmatprep.subr.bf16.mxu0 0
      %979 = vmatpush1.bf16.xpose.msra.mxu0 %v764
      %980 = vmatprep.subr.bf16.mxu0 0
      %981 = vmatpush1.bf16.xpose.msra.mxu0 %v767
      %982 = vmatprep.subr.bf16.mxu0 0
      %983 = vmatpush1.bf16.xpose.msra.mxu0 %v770
      %984 = vmatprep.subr.bf16.mxu0 0
      %985 = vmatpush1.bf16.xpose.msra.mxu0 %v773
      %986 = vmatprep.subr.bf16.mxu0 0
      %987 = vmatpush1.bf16.xpose.msra.mxu0 %v776
      %988 = vmatprep.subr.bf16.mxu0 0
      %989 = vmatpush1.bf16.xpose.msra.mxu0 %v972
      %990 = vmatprep.subr.bf16.mxu0 0
      %991 = vmatpush1.bf16.xpose.msra.mxu0 0
      %992 = vmatprep.subr.bf16.mxu0 0
      %993 = vmatpush1.bf16.xpose.msra.mxu0 0
      %994 = vmatprep.subr.bf16.mxu0 0
      %995 = vmatpush1.bf16.xpose.msra.mxu0 0
      %996 = vmatprep.subr.bf16.mxu0 0
      %997 = vmatpush1.bf16.xpose.msra.mxu0 0
      %998 = vmatprep.subr.bf16.mxu0 0
      %999 = vmatpush1.bf16.xpose.msra.mxu0 0
      %1000 = vmatprep.subr.bf16.mxu0 0
      %1001 = vmatpush1.bf16.xpose.msra.mxu0 0
      %1002 = vmatprep.subr.bf16.mxu0 0
      %1003 = vmatpush1.bf16.xpose.msra.mxu0 0
      %1004 = vmatprep.subr.bf16.mxu0 0
      %1005 = vmatpush1.bf16.xpose.msra.mxu0 0
      %1006 = vmatprep.mubr.bf16.mxu0 0
      %1007 = vmatmul.mubr.bf16.gmra.mrb[0].mxu0 %v969
      %v1008 = vpop.f32.mrb[0].mxu0
      %v1009 = vadd.f32 0.0, %v1008
      %v1010 = vpop.f32.mrb[0].mxu0
      %v1011 = vpop.f32.mrb[0].mxu0
      %v1012 = vpop.f32.mrb[0].mxu0
      %1013 = vdwg.mxu0
      %v1014 = vadd.f32 %v962, %v1009
      %1015 = vst [vmem:[#allocation2] sm:$0xff] %v1014
      %v1016 = vld [vmem:[#allocation2] sm:$0xff]
      %s1017 = scalar_lea.vmem %s1, 24
      %v1018 = vld [vmem:[%s1017] sm:$0xf]
      %v1021 = vunpack.c.l.b16 %v250
      %v1022 = vunpack.c.l.b16 %v251
      %v1023 = vpack.c.b16 %v1022, %v1021
      %v1025 = vsel %vm296, %v1018, 0
      %v1028 = vsel %vm296, %v1023, 0
      %1030 = vmatprep.subr.bf16.mxu0 0
      %1031 = vmatpush1.bf16.xpose.msra.mxu0 %v307
      %1032 = vmatprep.subr.bf16.mxu0 0
      %1033 = vmatpush1.bf16.xpose.msra.mxu0 %v310
      %1034 = vmatprep.subr.bf16.mxu0 0
      %1035 = vmatpush1.bf16.xpose.msra.mxu0 %v313
      %1036 = vmatprep.subr.bf16.mxu0 0
      %1037 = vmatpush1.bf16.xpose.msra.mxu0 %v316
      %1038 = vmatprep.subr.bf16.mxu0 0
      %1039 = vmatpush1.bf16.xpose.msra.mxu0 %v319
      %1040 = vmatprep.subr.bf16.mxu0 0
      %1041 = vmatpush1.bf16.xpose.msra.mxu0 %v322
      %1042 = vmatprep.subr.bf16.mxu0 0
      %1043 = vmatpush1.bf16.xpose.msra.mxu0 %v832
      %1044 = vmatprep.subr.bf16.mxu0 0
      %1045 = vmatpush1.bf16.xpose.msra.mxu0 %v1028
      %1046 = vmatprep.subr.bf16.mxu0 0
      %1047 = vmatpush1.bf16.xpose.msra.mxu0 0
      %1048 = vmatprep.subr.bf16.mxu0 0
      %1049 = vmatpush1.bf16.xpose.msra.mxu0 0
      %1050 = vmatprep.subr.bf16.mxu0 0
      %1051 = vmatpush1.bf16.xpose.msra.mxu0 0
      %1052 = vmatprep.subr.bf16.mxu0 0
      %1053 = vmatpush1.bf16.xpose.msra.mxu0 0
      %1054 = vmatprep.subr.bf16.mxu0 0
      %1055 = vmatpush1.bf16.xpose.msra.mxu0 0
      %1056 = vmatprep.subr.bf16.mxu0 0
      %1057 = vmatpush1.bf16.xpose.msra.mxu0 0
      %1058 = vmatprep.subr.bf16.mxu0 0
      %1059 = vmatpush1.bf16.xpose.msra.mxu0 0
      %1060 = vmatprep.subr.bf16.mxu0 0
      %1061 = vmatpush1.bf16.xpose.msra.mxu0 0
      %1062 = vmatprep.mubr.bf16.mxu0 0
      %1063 = vmatmul.mubr.bf16.gmra.mrb[0].mxu0 %v1025
      %v1064 = vpop.f32.mrb[0].mxu0
      %v1065 = vadd.f32 0.0, %v1064
      %v1066 = vpop.f32.mrb[0].mxu0
      %v1067 = vpop.f32.mrb[0].mxu0
      %v1068 = vpop.f32.mrb[0].mxu0
      %1069 = vdwg.mxu0
      %v1070 = vadd.f32 %v1016, %v1065
      %1071 = vst [vmem:[#allocation2] sm:$0xff] %v1070
      %v1073 = vshrl.u32 %v250, 16
      %v1075 = vrot.slane %v1073, 4
      %v1076 = vshll.u32 %v250, 16
      %v1078 = vrot.slane %v1076, 5
      %v1079 = vor.u32 %v1075, %v1078
      %v1080 = vrot.slane %v1079, 4
      %v1082 = vshll.u32 %v251, 16
      %v1084 = vrot.slane %v1082, 5
      %v1085 = vsel %vm368, %v1080, %v1084
      %v1086 = vshrl.u32 %v251, 16
      %v1088 = vrot.slane %v1086, 4
      %v1089 = vor.u32 %v1088, %v1084
      %v1090 = vrot.slane %v1089, 4
      %v1092 = vshll.u32 %v252, 16
      %v1094 = vrot.slane %v1092, 5
      %v1095 = vsel %vm368, %v1090, %v1094
      %v1096 = vld [vmem:[#allocation2] sm:$0xff]
      %s1097 = scalar_lea.vmem %s1, 28
      %v1098 = vld [vmem:[%s1097] sm:$0xf]
      %v1099 = vunpack.c.l.b16 %v1085
      %v1100 = vunpack.c.l.b16 %v1095
      %v1101 = vpack.c.b16 %v1100, %v1099
      %v1103 = vsel %vm296, %v1098, 0
      %v1106 = vsel %vm296, %v1101, 0
      %1108 = vmatprep.subr.bf16.mxu0 0
      %1109 = vmatpush1.bf16.xpose.msra.mxu0 %v598
      %1110 = vmatprep.subr.bf16.mxu0 0
      %1111 = vmatpush1.bf16.xpose.msra.mxu0 %v601
      %1112 = vmatprep.subr.bf16.mxu0 0
      %1113 = vmatpush1.bf16.xpose.msra.mxu0 %v604
      %1114 = vmatprep.subr.bf16.mxu0 0
      %1115 = vmatpush1.bf16.xpose.msra.mxu0 %v607
      %1116 = vmatprep.subr.bf16.mxu0 0
      %1117 = vmatpush1.bf16.xpose.msra.mxu0 %v610
      %1118 = vmatprep.subr.bf16.mxu0 0
      %1119 = vmatpush1.bf16.xpose.msra.mxu0 %v613
      %1120 = vmatprep.subr.bf16.mxu0 0
      %1121 = vmatpush1.bf16.xpose.msra.mxu0 %v910
      %1122 = vmatprep.subr.bf16.mxu0 0
      %1123 = vmatpush1.bf16.xpose.msra.mxu0 %v1106
      %1124 = vmatprep.subr.bf16.mxu0 0
      %1125 = vmatpush1.bf16.xpose.msra.mxu0 0
      %1126 = vmatprep.subr.bf16.mxu0 0
      %1127 = vmatpush1.bf16.xpose.msra.mxu0 0
      %1128 = vmatprep.subr.bf16.mxu0 0
      %1129 = vmatpush1.bf16.xpose.msra.mxu0 0
      %1130 = vmatprep.subr.bf16.mxu0 0
      %1131 = vmatpush1.bf16.xpose.msra.mxu0 0
      %1132 = vmatprep.subr.bf16.mxu0 0
      %1133 = vmatpush1.bf16.xpose.msra.mxu0 0
      %1134 = vmatprep.subr.bf16.mxu0 0
      %1135 = vmatpush1.bf16.xpose.msra.mxu0 0
      %1136 = vmatprep.subr.bf16.mxu0 0
      %1137 = vmatpush1.bf16.xpose.msra.mxu0 0
      %1138 = vmatprep.subr.bf16.mxu0 0
      %1139 = vmatpush1.bf16.xpose.msra.mxu0 0
      %1140 = vmatprep.mubr.bf16.mxu0 0
      %1141 = vmatmul.mubr.bf16.gmra.mrb[0].mxu0 %v1103
      %v1142 = vpop.f32.mrb[0].mxu0
      %v1143 = vadd.f32 0.0, %v1142
      %v1144 = vpop.f32.mrb[0].mxu0
      %v1145 = vpop.f32.mrb[0].mxu0
      %v1146 = vpop.f32.mrb[0].mxu0
      %1147 = vdwg.mxu0
      %v1148 = vadd.f32 %v1096, %v1143
      %1149 = vst [vmem:[#allocation2] sm:$0xff] %v1148
      %v1151 = vrot.slane %v250, 5
      %v1152 = vrot.slane %v1151, 4
      %v1153 = vrot.slane %v251, 5
      %v1154 = vsel %vm667, %v1152, %v1153
      %v1155 = vrot.slane %v1153, 4
      %v1156 = vrot.slane %v252, 5
      %v1157 = vsel %vm667, %v1155, %v1156
      %v1158 = vld [vmem:[#allocation2] sm:$0xff]
      %s1159 = scalar_lea.vmem %s1, 32
      %v1160 = vld [vmem:[%s1159] sm:$0xf]
      %v1161 = vunpack.c.l.b16 %v1154
      %v1162 = vunpack.c.l.b16 %v1157
      %v1163 = vpack.c.b16 %v1162, %v1161
      %v1165 = vsel %vm296, %v1160, 0
      %v1168 = vsel %vm296, %v1163, 0
      %1170 = vmatprep.subr.bf16.mxu0 0
      %1171 = vmatpush1.bf16.xpose.msra.mxu0 %v761
      %1172 = vmatprep.subr.bf16.mxu0 0
      %1173 = vmatpush1.bf16.xpose.msra.mxu0 %v764
      %1174 = vmatprep.subr.bf16.mxu0 0
      %1175 = vmatpush1.bf16.xpose.msra.mxu0 %v767
      %1176 = vmatprep.subr.bf16.mxu0 0
      %1177 = vmatpush1.bf16.xpose.msra.mxu0 %v770
      %1178 = vmatprep.subr.bf16.mxu0 0
      %1179 = vmatpush1.bf16.xpose.msra.mxu0 %v773
      %1180 = vmatprep.subr.bf16.mxu0 0
      %1181 = vmatpush1.bf16.xpose.msra.mxu0 %v776
      %1182 = vmatprep.subr.bf16.mxu0 0
      %1183 = vmatpush1.bf16.xpose.msra.mxu0 %v972
      %1184 = vmatprep.subr.bf16.mxu0 0
      %1185 = vmatpush1.bf16.xpose.msra.mxu0 %v1168
      %1186 = vmatprep.subr.bf16.mxu0 0
      %1187 = vmatpush1.bf16.xpose.msra.mxu0 0
      %1188 = vmatprep.subr.bf16.mxu0 0
      %1189 = vmatpush1.bf16.xpose.msra.mxu0 0
      %1190 = vmatprep.subr.bf16.mxu0 0
      %1191 = vmatpush1.bf16.xpose.msra.mxu0 0
      %1192 = vmatprep.subr.bf16.mxu0 0
      %1193 = vmatpush1.bf16.xpose.msra.mxu0 0
      %1194 = vmatprep.subr.bf16.mxu0 0
      %1195 = vmatpush1.bf16.xpose.msra.mxu0 0
      %1196 = vmatprep.subr.bf16.mxu0 0
      %1197 = vmatpush1.bf16.xpose.msra.mxu0 0
      %1198 = vmatprep.subr.bf16.mxu0 0
      %1199 = vmatpush1.bf16.xpose.msra.mxu0 0
      %1200 = vmatprep.subr.bf16.mxu0 0
      %1201 = vmatpush1.bf16.xpose.msra.mxu0 0
      %1202 = vmatprep.mubr.bf16.mxu0 0
      %1203 = vmatmul.mubr.bf16.gmra.mrb[0].mxu0 %v1165
      %v1204 = vpop.f32.mrb[0].mxu0
      %v1205 = vadd.f32 0.0, %v1204
      %v1206 = vpop.f32.mrb[0].mxu0
      %v1207 = vpop.f32.mrb[0].mxu0
      %v1208 = vpop.f32.mrb[0].mxu0
      %1209 = vdwg.mxu0
      %v1210 = vadd.f32 %v1158, %v1205
      %1211 = vst [vmem:[#allocation2] sm:$0xff] %v1210
      %v1212 = vld [vmem:[#allocation2] sm:$0xff]
      %v1213 = vld [vmem:[%s2] sm:$0xff]
      %1215 = vset.pattern.permute.xlu0 0
      %1216 = vperm.xlu0 %1215, %v1213
      %v1217 = vpop.permute.xlu0 %1216
      %v1219 = vmul.f32 %v1212, %v1217
      %v1220 = vld [vmem:[%s3] sm:$0xff]
      %1222 = vset.pattern.permute.xlu0 0
      %1223 = vperm.xlu0 %1222, %v1220
      %v1224 = vpop.permute.xlu0 %1223
      %v1226 = vadd.f32 %v1219, %v1224
      %vm1227 = vcmp.gt.f32.partialorder %v1226, 0.0
      %v1228 = vmul.f32 %v1226, 0.1
      %v1229 = vsel %vm1227, %v1226, %v1228
      %v1230 = vpack.c.bf16 %v1229, %v1229
      %1231 = vst [vmem:[%s217] sm:$0xf] %v1230
      %p1232 = scmp.lt.s32.totalorder %s19, 1
      %s1233 = scalar_select %p1232, %s19, 1
      %p1234 = scmp.lt.s32.totalorder %s20, 1
      %s1235 = scalar_select %p1234, %s20, 1
      %s1236 = smul.addr %s1233, 2
      %s1237 = sadd.s32 %s1235, %s1236
      %s1238 = smul.addr %s1237, 4
      %s1239 = scalar_lea.vmem %s4, %s1238
      // Predicated region
      $region37: #{littlenet_forward.1} parent=35 // pred_check
        %p1240 = pneg %p136
      $region38: #{littlenet_forward.1} parent=35 // pred_check_branch
        %1242 = sbr.rel (%p1240) target = $region40
      $region39: #{littlenet_forward.1} parent=35 // pred_region
        _
      $region40: #{littlenet_forward.1} parent=35 // pred_fallthru
        _
    $region36: #{littlenet_forward.1} parent=5 // pred_fallthru
      _
    %p1243 = scmp.le.s32.totalorder 2, %s10
    // Predicated region
    $region41: #{littlenet_forward.1} parent=5 // pred_check
      %p1244 = pneg %p1243
    $region42: #{littlenet_forward.1} parent=5 // pred_check_branch
      %1246 = sbr.rel (%p1244) target = $region44
    $region43: #{littlenet_forward.1} parent=5 // pred_region
      %s1247 = ssub.s32 %s10, 2
      // Predicated region
      $region45: #{littlenet_forward.1} parent=43 // pred_check
        %p1248 = pneg %p142
      $region46: #{littlenet_forward.1} parent=43 // pred_check_branch
        %1250 = sbr.rel (%p1248) target = $region48
      $region47: #{littlenet_forward.1} parent=43 // pred_region
        %p1251 = scmp.lt.s32.totalorder %s21, 1
        %s1252 = scalar_select %p1251, %s21, 1
        %p1253 = scmp.lt.s32.totalorder %s22, 1
        %s1254 = scalar_select %p1253, %s22, 1
        %s1255 = smul.addr %s1252, 2
        %s1256 = sadd.s32 %s1254, %s1255
        %s1257 = smul.addr %s1256, 4
        %s1258 = scalar_lea.vmem %s4, %s1257
      $region48: #{littlenet_forward.1} parent=43 // pred_fallthru
        _
    $region44: #{littlenet_forward.1} parent=5 // pred_fallthru
      _
  $region6: #{littlenet_forward.1} parent=0 // loop_footer
    %s14 = sadd.s32 1, %s10
  $region7: #{littlenet_forward.1} parent=0 // loop_footer_branch
    %9 = sbr.rel target = $region3
  $region8: #{littlenet_forward.1} parent=0 // loop_exit
    _

</llo_original>
